<compile_context>
chip_gen: v5e
topology: v5e:2x2
jax: 0.10.0
libtpu: 0.0.40
codegen_flags: <defaults>
</compile_context>

<pallas_src>
import numpy as np
import jax
import jax.numpy as jnp
from jax import lax
from jax.experimental import pallas as pl
from jax.experimental.pallas import tpu as pltpu

# ---------------- encoding config (synthetic, deterministic) ----------------
ENCODING_CONFIG = dict(
    n_levels=4,
    n_features_per_level=2,
    base_resolution=4,
    per_level_scale=2.0,
)
BATCH_SIZE_GRANULARITY = 128   # tcnn batch_size_granularity()
MAX_TILE_B = 2048              # lane tile; live set is tiny, fits every gen


def _level_geometry(cfg):
    n_levels = cfg["n_levels"]
    pls = cfg["per_level_scale"]
    base = cfg["base_resolution"]
    nf = cfg["n_features_per_level"]
    scale = np.floor(np.power(pls, np.arange(n_levels, dtype="d"), dtype="d") * base - 1)
    max_pos = scale.astype(int)
    res = max_pos + 1
    level_table_size = (np.ceil(res.astype("d") ** 2 / 8) * 8 * nf).astype(int)
    level_start = np.add.accumulate(
        np.concatenate([np.array([0]), level_table_size[:-1]])
    ).astype(int)
    n_params = int(level_start[-1] + level_table_size[-1])
    n_verts = (res ** 2).astype(int)
    vert_offsets = np.concatenate([[0], np.cumsum(n_verts)[:-1]]).astype(int)
    n_verts_total = int(np.sum(n_verts))
    return (max_pos, res, level_table_size, level_start, n_params,
            n_verts, vert_offsets, n_verts_total)


def _boundary_indices(cfg):
    """Reproduce Module1.__init__ boundary/inner index construction."""
    nf = cfg["n_features_per_level"]
    (max_pos_list, res_list, _, level_start, n_params, _, _, _) = _level_geometry(cfg)
    left_idx, right_idx, bottom_idx, top_idx = [], [], [], []
    for max_pos, res, start_idx in zip(max_pos_list, res_list, level_start):
        all_pos = np.arange(max_pos + 1)
        per_side = [all_pos * res, max_pos + all_pos * res, all_pos, all_pos + max_pos * res]
        for level_idx, grid_idx in zip(per_side, [left_idx, right_idx, bottom_idx, top_idx]):
            idx = level_idx * nf
            idx = start_idx + np.concatenate([idx + j for j in range(nf)])
            grid_idx.append(idx)
    left = np.concatenate(left_idx)
    right = np.concatenate(right_idx)
    bottom = np.concatenate(bottom_idx)
    top = np.concatenate(top_idx)
    inner = np.delete(np.arange(n_params), np.concatenate([left, right, bottom, top]))
    return left, right, bottom, top, inner


# --------------------------- Pallas kernel ----------------------------------
def _make_grid_encode_kernel(res_list, hpad_list, row_base_list, nf, tile_b):
    res_list = [int(r) for r in res_list]
    hpad_list = [int(h) for h in hpad_list]
    row_base_list = [int(b) for b in row_base_list]

    def kernel(xy_ref, g_ref, out_ref):
        # xy_ref : (2, TB)  rows 0/1 = x/y coordinate of each point (lanes = batch)
        # g_ref  : (M, K)   packed separable grid matrix (VMEM resident)
        # out_ref: (n_out, TB)
        xu = jnp.clip(xy_ref[0:1, :], 0.0, 1.0)     # (1, TB)
        yu = jnp.clip(xy_ref[1:2, :], 0.0, 1.0)     # (1, TB)

        hx_blocks = []
        hy_blocks = []
        for r, hpad in zip(res_list, hpad_list):
            scale = float(r - 1)
            hi = float(max(r - 2, 0))
            px = xu * scale
            py = yu * scale
            x0 = jnp.clip(jnp.floor(px), 0.0, hi)
            y0 = jnp.clip(jnp.floor(py), 0.0, hi)
            wx = px - x0                             # (1, TB)
            wy = py - y0                             # (1, TB)
            x0i = x0.astype(jnp.int32)
            y0i = y0.astype(jnp.int32)

            # separable 1-D "hat" weight vectors, padded to a multiple of 8
            # sublanes (rows >= r are zero since the corner indices are < r)
            rows = lax.broadcasted_iota(jnp.int32, (hpad, tile_b), 0)
            hx = jnp.where(rows == x0i, 1.0 - wx,
                           jnp.where(rows == x0i + 1, wx, 0.0))
            hy = jnp.where(rows == y0i, 1.0 - wy,
                           jnp.where(rows == y0i + 1, wy, 0.0))
            hx_blocks.append(hx)
            hy_blocks.append(hy)

        # stage 1: one fused MXU matmul over all levels (contract over x)
        hx_all = jnp.concatenate(hx_blocks, axis=0)      # (K, TB)
        t_all = jnp.dot(g_ref[...], hx_all,
                        preferred_element_type=jnp.float32,
                        precision=lax.Precision.HIGHEST)  # (M, TB)

        # stage 2: per (level, feature) weighted sublane reduction over y
        for lvl, (hpad, base) in enumerate(zip(hpad_list, row_base_list)):
            hy = hy_blocks[lvl]                           # (hpad, TB)
            for f in range(nf):
                lo = base + f * hpad                      # multiple of 8
                seg = t_all[lo:lo + hpad, :]              # (hpad, TB)
                row = jnp.sum(seg * hy, axis=0, keepdims=True)   # (1, TB)
                o = lvl * nf + f
                out_ref[o:o + 1, :] = row

    return kernel


def grid_encode_pallas(xy, g_mat, res_list, hpad_list, row_base_list, nf, tile_b):
    """xy: (2, B_pad) f32 coords; g_mat: (M, K) packed separable grids."""
    m_rows, k_cols = g_mat.shape
    n_out = nf * len(list(res_list))
    B = xy.shape[1]
    assert B % tile_b == 0
    kernel = _make_grid_encode_kernel(res_list, hpad_list, row_base_list, nf, tile_b)

    return pl.pallas_call(
        kernel,
        out_shape=jax.ShapeDtypeStruct((n_out, B), jnp.float32),
        grid_spec=pltpu.PrefetchScalarGridSpec(
            num_scalar_prefetch=0,
            grid=(B // tile_b,),
            in_specs=[
                pl.BlockSpec((2, tile_b), lambda i: (0, i)),        # coords (full 2-row extent)
                pl.BlockSpec((m_rows, k_cols), lambda i: (0, 0)),   # packed grids, resident
            ],
            out_specs=pl.BlockSpec((n_out, tile_b), lambda i: (0, i)),
        ),
        compiler_params=pltpu.CompilerParams(
            dimension_semantics=("parallel",),   # batch tiles are independent
        ),
    )(xy, g_mat)


def _pick_tile_b(padded_batch):
    g = BATCH_SIZE_GRANULARITY
    t = min(MAX_TILE_B, padded_batch)
    # prefer >= 2 grid steps so both v7x TensorCores get work
    if padded_batch >= 2 * g and t > padded_batch // 2:
        t = padded_batch // 2
    t = max((t // g) * g, g)                 # multiple of 128 lanes
    while padded_batch % t:
        t -= g                               # padded_batch is a multiple of 128 -> terminates
    return t


# --------------------------- Module wrapper ----------------------------------
class Module1Pallas:
    def __init__(self, seed=1337, cfg=ENCODING_CONFIG):
        self.cfg = cfg
        self.n_input_dims = 2
        self.n_output_dims = cfg["n_levels"] * cfg["n_features_per_level"]
        self.loss_scale = 1.0  # fp32 path

        (self.max_pos_list, self.res_list, self.level_table_size,
         self.level_start, self.n_params, self.n_verts, self.vert_offsets,
         self.n_verts_total) = _level_geometry(cfg)

        nf = cfg["n_features_per_level"]
        # per-level padded row-block height (multiple of 8 sublanes)
        self.hpad_list = [int((int(r) + 7) // 8 * 8) for r in self.res_list]
        self.col_off_list = [int(v) for v in
                             np.concatenate([[0], np.cumsum(self.hpad_list)[:-1]])]
        self.row_base_list = [int(v) for v in
                              np.concatenate([[0], np.cumsum([nf * h for h in self.hpad_list])[:-1]])]
        self.k_cols = int(sum(self.hpad_list))
        self.m_rows = int(nf * sum(self.hpad_list))
        assert all(h % 8 == 0 for h in self.hpad_list)
        assert all(b % 8 == 0 for b in self.row_base_list)

        # deterministic initial params (tcnn dense-grid-style small uniform init)
        key = jax.random.PRNGKey(seed)
        initial_params = jax.random.uniform(
            key, (self.n_params,), dtype=jnp.float32, minval=-1e-1, maxval=1e-1)

        (self.boundary_idx_left, self.boundary_idx_right,
         self.boundary_idx_bottom, self.boundary_idx_top,
         self.inner_idx) = _boundary_indices(cfg)

        self.params = initial_params
        self.params_top = initial_params[self.boundary_idx_top]
        self.params_bottom = initial_params[self.boundary_idx_bottom]
        self.params_left = initial_params[self.boundary_idx_left]
        self.params_right = initial_params[self.boundary_idx_right]
        self.params_inner = initial_params[self.inner_idx]

        # Assemble params and pack the separable grid matrix ONCE (out of the
        # per-call path). Call refresh_params() after mutating any params_*.
        self._g_matrix = jax.block_until_ready(self._build_g_matrix())

    def _assemble_params(self):
        # mirrors: my_params = params.clone(); my_params[idx] = piece ...
        p = self.params
        p = p.at[jnp.asarray(self.inner_idx)].set(self.params_inner)
        p = p.at[jnp.asarray(self.boundary_idx_top)].set(self.params_top)
        p = p.at[jnp.asarray(self.boundary_idx_bottom)].set(self.params_bottom)
        p = p.at[jnp.asarray(self.boundary_idx_right)].set(self.params_right)
        p = p.at[jnp.asarray(self.boundary_idx_left)].set(self.params_left)
        return p

    def _build_g_matrix(self):
        """Pack per-level grids into the separable (M, K) block matrix.

        G[base_l + f*hpad_l + y, xoff_l + x] = grid_l[y*r + x, f]
        so that  out[l*nf+f] = sum_y hy_l[y] * sum_x G[...] * hx_l[x].
        """
        p = self._assemble_params()
        nf = self.cfg["n_features_per_level"]
        g = jnp.zeros((self.m_rows, self.k_cols), jnp.float32)
        for lvl in range(self.cfg["n_levels"]):
            r = int(self.res_list[lvl])
            hpad = self.hpad_list[lvl]
            start = int(self.level_start[lvl])
            base = self.row_base_list[lvl]
            xoff = self.col_off_list[lvl]
            grid_l = p[start:start + r * r * nf].reshape(r, r, nf)   # [y, x, f]
            for f in range(nf):
                g = g.at[base + f * hpad: base + f * hpad + r,
                         xoff: xoff + r].set(grid_l[:, :, f])
        return g

    def refresh_params(self):
        self._g_matrix = self._build_g_matrix()

    def __call__(self, x):
        x = jnp.asarray(x, jnp.float32)
        batch_size = x.shape[0]
        g = BATCH_SIZE_GRANULARITY
        padded = (batch_size + g - 1) // g * g
        tile_b = _pick_tile_b(padded)

        # lane-dense input: 2 coordinate rows, batch on lanes
        xy = jnp.zeros((2, padded), jnp.float32).at[:, :batch_size].set(x.T)

        out_t = grid_encode_pallas(xy, self._g_matrix, self.res_list,
                                   self.hpad_list, self.row_base_list,
                                   self.cfg["n_features_per_level"], tile_b)
        # transpose back to (batch, features) in the wrapper
        return out_t.T[:batch_size, :self.n_output_dims]


# --------------------------- reference (pure JAX) -----------------------------
def _reference(module, x):
    cfg = module.cfg
    nf = cfg["n_features_per_level"]
    p = module._assemble_params()
    outs = []
    xc = jnp.clip(x.astype(jnp.float32), 0.0, 1.0)
    for lvl in range(cfg["n_levels"]):
        res = int(module.res_list[lvl])
        start = int(module.level_start[lvl])
        size = int(module.level_table_size[lvl])
        grid = p[start:start + size].reshape(size // nf, nf)
        pos = xc * float(res - 1)
        p0 = jnp.clip(jnp.floor(pos), 0.0, max(res - 2, 0))
        w = pos - p0
        p0i = p0.astype(jnp.int32)
        x0, y0 = p0i[:, 0], p0i[:, 1]
        wx, wy = w[:, 0:1], w[:, 1:2]
        f = (grid[y0 * res + x0] * (1 - wx) * (1 - wy)
             + grid[y0 * res + x0 + 1] * wx * (1 - wy)
             + grid[(y0 + 1) * res + x0] * (1 - wx) * wy
             + grid[(y0 + 1) * res + x0 + 1] * wx * wy)
        outs.append(f)
    return jnp.concatenate(outs, axis=-1)


if __name__ == "__main__":
    module = Module1Pallas(seed=1337)

    key = jax.random.PRNGKey(0)
    batch = 10  # exercises padding to BATCH_SIZE_GRANULARITY
    x = jax.random.uniform(key, (batch, 2), dtype=jnp.float32)

    out = module(x)
    out = jax.block_until_ready(out)

    ref = _reference(module, x)
    np.testing.assert_allclose(np.asarray(out), np.asarray(ref), rtol=1e-5, atol=1e-5)

    assert out.shape == (batch, module.n_output_dims)
    print("KERNEL_OK")
</pallas_src>

<mosaic_0001>
module attributes {stable_mosaic.version = 11 : i64} {
  func.func @kernel(%arg0: i32, %arg1: memref<2x128xf32, #tpu.memory_space<vmem>>, %arg2: memref<128x64xf32, #tpu.memory_space<vmem>>, %arg3: memref<8x128xf32, #tpu.memory_space<vmem>>) attributes {dimension_semantics = [#tpu.dimension_semantics<parallel>], iteration_bounds = array<i64: 1>, scalar_prefetch = 0 : i64, scratch_operands = 0 : i64, tpu.core_type = #tpu.core_type<tc>, window_params = [{transform_indices = @transform_0, window_bounds = array<i64: 2, 128>}, {pipeline_mode = #tpu.pipeline_mode<synchronous>, transform_indices = @transform_1, window_bounds = array<i64: 128, 64>}, {transform_indices = @transform_2, window_bounds = array<i64: 8, 128>}]} {
    %c0 = arith.constant 0 : index
    %c0_0 = arith.constant 0 : index
    %0 = vector.load %arg1[%c0, %c0_0] : memref<2x128xf32, #tpu.memory_space<vmem>>, vector<1x128xf32>
    %cst = arith.constant 0.000000e+00 : f32
    %cst_1 = arith.constant 1.000000e+00 : f32
    %1 = vector.broadcast %cst : f32 to vector<1x128xf32>
    %2 = arith.maximumf %1, %0 : vector<1x128xf32>
    %3 = vector.broadcast %cst_1 : f32 to vector<1x128xf32>
    %4 = arith.minimumf %3, %2 : vector<1x128xf32>
    %c1 = arith.constant 1 : index
    %c0_2 = arith.constant 0 : index
    %5 = vector.load %arg1[%c1, %c0_2] : memref<2x128xf32, #tpu.memory_space<vmem>>, vector<1x128xf32>
    %cst_3 = arith.constant 0.000000e+00 : f32
    %cst_4 = arith.constant 1.000000e+00 : f32
    %6 = vector.broadcast %cst_3 : f32 to vector<1x128xf32>
    %7 = arith.maximumf %6, %5 : vector<1x128xf32>
    %8 = vector.broadcast %cst_4 : f32 to vector<1x128xf32>
    %9 = arith.minimumf %8, %7 : vector<1x128xf32>
    %cst_5 = arith.constant 3.000000e+00 : f32
    %10 = vector.broadcast %cst_5 : f32 to vector<1x128xf32>
    %11 = arith.mulf %4, %10 : vector<1x128xf32>
    %cst_6 = arith.constant 3.000000e+00 : f32
    %12 = vector.broadcast %cst_6 : f32 to vector<1x128xf32>
    %13 = arith.mulf %9, %12 : vector<1x128xf32>
    %14 = math.floor %11 : vector<1x128xf32>
    %cst_7 = arith.constant 0.000000e+00 : f32
    %cst_8 = arith.constant 2.000000e+00 : f32
    %15 = vector.broadcast %cst_7 : f32 to vector<1x128xf32>
    %16 = arith.maximumf %15, %14 : vector<1x128xf32>
    %17 = vector.broadcast %cst_8 : f32 to vector<1x128xf32>
    %18 = arith.minimumf %17, %16 : vector<1x128xf32>
    %19 = math.floor %13 : vector<1x128xf32>
    %cst_9 = arith.constant 0.000000e+00 : f32
    %cst_10 = arith.constant 2.000000e+00 : f32
    %20 = vector.broadcast %cst_9 : f32 to vector<1x128xf32>
    %21 = arith.maximumf %20, %19 : vector<1x128xf32>
    %22 = vector.broadcast %cst_10 : f32 to vector<1x128xf32>
    %23 = arith.minimumf %22, %21 : vector<1x128xf32>
    %24 = arith.subf %11, %18 : vector<1x128xf32>
    %25 = arith.subf %13, %23 : vector<1x128xf32>
    %26 = arith.fptosi %18 : vector<1x128xf32> to vector<1x128xi32>
    %27 = arith.fptosi %23 : vector<1x128xf32> to vector<1x128xi32>
    %28 = tpu.iota {dimensions = array<i32: 0>} : vector<8x128xi32>
    %29 = vector.broadcast %26 : vector<1x128xi32> to vector<8x128xi32>
    %30 = arith.cmpi eq, %28, %29 : vector<8x128xi32>
    %cst_11 = arith.constant 1.000000e+00 : f32
    %31 = vector.broadcast %cst_11 : f32 to vector<1x128xf32>
    %32 = arith.subf %31, %24 : vector<1x128xf32>
    %c1_i32 = arith.constant 1 : i32
    %33 = vector.broadcast %c1_i32 : i32 to vector<1x128xi32>
    %34 = arith.addi %26, %33 : vector<1x128xi32>
    %35 = vector.broadcast %34 : vector<1x128xi32> to vector<8x128xi32>
    %36 = arith.cmpi eq, %28, %35 : vector<8x128xi32>
    %cst_12 = arith.constant 0.000000e+00 : f32
    %37 = vector.shape_cast %24 : vector<1x128xf32> to vector<1x128xf32>
    %38 = vector.broadcast %37 : vector<1x128xf32> to vector<8x128xf32>
    %39 = vector.broadcast %cst_12 : f32 to vector<8x128xf32>
    %40 = arith.select %36, %38, %39 : vector<8x128xi1>, vector<8x128xf32>
    %41 = vector.shape_cast %32 : vector<1x128xf32> to vector<1x128xf32>
    %42 = vector.broadcast %41 : vector<1x128xf32> to vector<8x128xf32>
    %43 = arith.select %30, %42, %40 : vector<8x128xi1>, vector<8x128xf32>
    %44 = vector.broadcast %27 : vector<1x128xi32> to vector<8x128xi32>
    %45 = arith.cmpi eq, %28, %44 : vector<8x128xi32>
    %cst_13 = arith.constant 1.000000e+00 : f32
    %46 = vector.broadcast %cst_13 : f32 to vector<1x128xf32>
    %47 = arith.subf %46, %25 : vector<1x128xf32>
    %c1_i32_14 = arith.constant 1 : i32
    %48 = vector.broadcast %c1_i32_14 : i32 to vector<1x128xi32>
    %49 = arith.addi %27, %48 : vector<1x128xi32>
    %50 = vector.broadcast %49 : vector<1x128xi32> to vector<8x128xi32>
    %51 = arith.cmpi eq, %28, %50 : vector<8x128xi32>
    %cst_15 = arith.constant 0.000000e+00 : f32
    %52 = vector.shape_cast %25 : vector<1x128xf32> to vector<1x128xf32>
    %53 = vector.broadcast %52 : vector<1x128xf32> to vector<8x128xf32>
    %54 = vector.broadcast %cst_15 : f32 to vector<8x128xf32>
    %55 = arith.select %51, %53, %54 : vector<8x128xi1>, vector<8x128xf32>
    %56 = vector.shape_cast %47 : vector<1x128xf32> to vector<1x128xf32>
    %57 = vector.broadcast %56 : vector<1x128xf32> to vector<8x128xf32>
    %58 = arith.select %45, %57, %55 : vector<8x128xi1>, vector<8x128xf32>
    %cst_16 = arith.constant 7.000000e+00 : f32
    %59 = vector.broadcast %cst_16 : f32 to vector<1x128xf32>
    %60 = arith.mulf %4, %59 : vector<1x128xf32>
    %cst_17 = arith.constant 7.000000e+00 : f32
    %61 = vector.broadcast %cst_17 : f32 to vector<1x128xf32>
    %62 = arith.mulf %9, %61 : vector<1x128xf32>
    %63 = math.floor %60 : vector<1x128xf32>
    %cst_18 = arith.constant 0.000000e+00 : f32
    %cst_19 = arith.constant 6.000000e+00 : f32
    %64 = vector.broadcast %cst_18 : f32 to vector<1x128xf32>
    %65 = arith.maximumf %64, %63 : vector<1x128xf32>
    %66 = vector.broadcast %cst_19 : f32 to vector<1x128xf32>
    %67 = arith.minimumf %66, %65 : vector<1x128xf32>
    %68 = math.floor %62 : vector<1x128xf32>
    %cst_20 = arith.constant 0.000000e+00 : f32
    %cst_21 = arith.constant 6.000000e+00 : f32
    %69 = vector.broadcast %cst_20 : f32 to vector<1x128xf32>
    %70 = arith.maximumf %69, %68 : vector<1x128xf32>
    %71 = vector.broadcast %cst_21 : f32 to vector<1x128xf32>
    %72 = arith.minimumf %71, %70 : vector<1x128xf32>
    %73 = arith.subf %60, %67 : vector<1x128xf32>
    %74 = arith.subf %62, %72 : vector<1x128xf32>
    %75 = arith.fptosi %67 : vector<1x128xf32> to vector<1x128xi32>
    %76 = arith.fptosi %72 : vector<1x128xf32> to vector<1x128xi32>
    %77 = tpu.iota {dimensions = array<i32: 0>} : vector<8x128xi32>
    %78 = vector.broadcast %75 : vector<1x128xi32> to vector<8x128xi32>
    %79 = arith.cmpi eq, %77, %78 : vector<8x128xi32>
    %cst_22 = arith.constant 1.000000e+00 : f32
    %80 = vector.broadcast %cst_22 : f32 to vector<1x128xf32>
    %81 = arith.subf %80, %73 : vector<1x128xf32>
    %c1_i32_23 = arith.constant 1 : i32
    %82 = vector.broadcast %c1_i32_23 : i32 to vector<1x128xi32>
    %83 = arith.addi %75, %82 : vector<1x128xi32>
    %84 = vector.broadcast %83 : vector<1x128xi32> to vector<8x128xi32>
    %85 = arith.cmpi eq, %77, %84 : vector<8x128xi32>
    %cst_24 = arith.constant 0.000000e+00 : f32
    %86 = vector.shape_cast %73 : vector<1x128xf32> to vector<1x128xf32>
    %87 = vector.broadcast %86 : vector<1x128xf32> to vector<8x128xf32>
    %88 = vector.broadcast %cst_24 : f32 to vector<8x128xf32>
    %89 = arith.select %85, %87, %88 : vector<8x128xi1>, vector<8x128xf32>
    %90 = vector.shape_cast %81 : vector<1x128xf32> to vector<1x128xf32>
    %91 = vector.broadcast %90 : vector<1x128xf32> to vector<8x128xf32>
    %92 = arith.select %79, %91, %89 : vector<8x128xi1>, vector<8x128xf32>
    %93 = vector.broadcast %76 : vector<1x128xi32> to vector<8x128xi32>
    %94 = arith.cmpi eq, %77, %93 : vector<8x128xi32>
    %cst_25 = arith.constant 1.000000e+00 : f32
    %95 = vector.broadcast %cst_25 : f32 to vector<1x128xf32>
    %96 = arith.subf %95, %74 : vector<1x128xf32>
    %c1_i32_26 = arith.constant 1 : i32
    %97 = vector.broadcast %c1_i32_26 : i32 to vector<1x128xi32>
    %98 = arith.addi %76, %97 : vector<1x128xi32>
    %99 = vector.broadcast %98 : vector<1x128xi32> to vector<8x128xi32>
    %100 = arith.cmpi eq, %77, %99 : vector<8x128xi32>
    %cst_27 = arith.constant 0.000000e+00 : f32
    %101 = vector.shape_cast %74 : vector<1x128xf32> to vector<1x128xf32>
    %102 = vector.broadcast %101 : vector<1x128xf32> to vector<8x128xf32>
    %103 = vector.broadcast %cst_27 : f32 to vector<8x128xf32>
    %104 = arith.select %100, %102, %103 : vector<8x128xi1>, vector<8x128xf32>
    %105 = vector.shape_cast %96 : vector<1x128xf32> to vector<1x128xf32>
    %106 = vector.broadcast %105 : vector<1x128xf32> to vector<8x128xf32>
    %107 = arith.select %94, %106, %104 : vector<8x128xi1>, vector<8x128xf32>
    %cst_28 = arith.constant 1.500000e+01 : f32
    %108 = vector.broadcast %cst_28 : f32 to vector<1x128xf32>
    %109 = arith.mulf %4, %108 : vector<1x128xf32>
    %cst_29 = arith.constant 1.500000e+01 : f32
    %110 = vector.broadcast %cst_29 : f32 to vector<1x128xf32>
    %111 = arith.mulf %9, %110 : vector<1x128xf32>
    %112 = math.floor %109 : vector<1x128xf32>
    %cst_30 = arith.constant 0.000000e+00 : f32
    %cst_31 = arith.constant 1.400000e+01 : f32
    %113 = vector.broadcast %cst_30 : f32 to vector<1x128xf32>
    %114 = arith.maximumf %113, %112 : vector<1x128xf32>
    %115 = vector.broadcast %cst_31 : f32 to vector<1x128xf32>
    %116 = arith.minimumf %115, %114 : vector<1x128xf32>
    %117 = math.floor %111 : vector<1x128xf32>
    %cst_32 = arith.constant 0.000000e+00 : f32
    %cst_33 = arith.constant 1.400000e+01 : f32
    %118 = vector.broadcast %cst_32 : f32 to vector<1x128xf32>
    %119 = arith.maximumf %118, %117 : vector<1x128xf32>
    %120 = vector.broadcast %cst_33 : f32 to vector<1x128xf32>
    %121 = arith.minimumf %120, %119 : vector<1x128xf32>
    %122 = arith.subf %109, %116 : vector<1x128xf32>
    %123 = arith.subf %111, %121 : vector<1x128xf32>
    %124 = arith.fptosi %116 : vector<1x128xf32> to vector<1x128xi32>
    %125 = arith.fptosi %121 : vector<1x128xf32> to vector<1x128xi32>
    %126 = tpu.iota {dimensions = array<i32: 0>} : vector<16x128xi32>
    %127 = vector.broadcast %124 : vector<1x128xi32> to vector<16x128xi32>
    %128 = arith.cmpi eq, %126, %127 : vector<16x128xi32>
    %cst_34 = arith.constant 1.000000e+00 : f32
    %129 = vector.broadcast %cst_34 : f32 to vector<1x128xf32>
    %130 = arith.subf %129, %122 : vector<1x128xf32>
    %c1_i32_35 = arith.constant 1 : i32
    %131 = vector.broadcast %c1_i32_35 : i32 to vector<1x128xi32>
    %132 = arith.addi %124, %131 : vector<1x128xi32>
    %133 = vector.broadcast %132 : vector<1x128xi32> to vector<16x128xi32>
    %134 = arith.cmpi eq, %126, %133 : vector<16x128xi32>
    %cst_36 = arith.constant 0.000000e+00 : f32
    %135 = vector.shape_cast %122 : vector<1x128xf32> to vector<1x128xf32>
    %136 = vector.broadcast %135 : vector<1x128xf32> to vector<16x128xf32>
    %137 = vector.broadcast %cst_36 : f32 to vector<16x128xf32>
    %138 = arith.select %134, %136, %137 : vector<16x128xi1>, vector<16x128xf32>
    %139 = vector.shape_cast %130 : vector<1x128xf32> to vector<1x128xf32>
    %140 = vector.broadcast %139 : vector<1x128xf32> to vector<16x128xf32>
    %141 = arith.select %128, %140, %138 : vector<16x128xi1>, vector<16x128xf32>
    %142 = vector.broadcast %125 : vector<1x128xi32> to vector<16x128xi32>
    %143 = arith.cmpi eq, %126, %142 : vector<16x128xi32>
    %cst_37 = arith.constant 1.000000e+00 : f32
    %144 = vector.broadcast %cst_37 : f32 to vector<1x128xf32>
    %145 = arith.subf %144, %123 : vector<1x128xf32>
    %c1_i32_38 = arith.constant 1 : i32
    %146 = vector.broadcast %c1_i32_38 : i32 to vector<1x128xi32>
    %147 = arith.addi %125, %146 : vector<1x128xi32>
    %148 = vector.broadcast %147 : vector<1x128xi32> to vector<16x128xi32>
    %149 = arith.cmpi eq, %126, %148 : vector<16x128xi32>
    %cst_39 = arith.constant 0.000000e+00 : f32
    %150 = vector.shape_cast %123 : vector<1x128xf32> to vector<1x128xf32>
    %151 = vector.broadcast %150 : vector<1x128xf32> to vector<16x128xf32>
    %152 = vector.broadcast %cst_39 : f32 to vector<16x128xf32>
    %153 = arith.select %149, %151, %152 : vector<16x128xi1>, vector<16x128xf32>
    %154 = vector.shape_cast %145 : vector<1x128xf32> to vector<1x128xf32>
    %155 = vector.broadcast %154 : vector<1x128xf32> to vector<16x128xf32>
    %156 = arith.select %143, %155, %153 : vector<16x128xi1>, vector<16x128xf32>
    %cst_40 = arith.constant 3.100000e+01 : f32
    %157 = vector.broadcast %cst_40 : f32 to vector<1x128xf32>
    %158 = arith.mulf %4, %157 : vector<1x128xf32>
    %cst_41 = arith.constant 3.100000e+01 : f32
    %159 = vector.broadcast %cst_41 : f32 to vector<1x128xf32>
    %160 = arith.mulf %9, %159 : vector<1x128xf32>
    %161 = math.floor %158 : vector<1x128xf32>
    %cst_42 = arith.constant 0.000000e+00 : f32
    %cst_43 = arith.constant 3.000000e+01 : f32
    %162 = vector.broadcast %cst_42 : f32 to vector<1x128xf32>
    %163 = arith.maximumf %162, %161 : vector<1x128xf32>
    %164 = vector.broadcast %cst_43 : f32 to vector<1x128xf32>
    %165 = arith.minimumf %164, %163 : vector<1x128xf32>
    %166 = math.floor %160 : vector<1x128xf32>
    %cst_44 = arith.constant 0.000000e+00 : f32
    %cst_45 = arith.constant 3.000000e+01 : f32
    %167 = vector.broadcast %cst_44 : f32 to vector<1x128xf32>
    %168 = arith.maximumf %167, %166 : vector<1x128xf32>
    %169 = vector.broadcast %cst_45 : f32 to vector<1x128xf32>
    %170 = arith.minimumf %169, %168 : vector<1x128xf32>
    %171 = arith.subf %158, %165 : vector<1x128xf32>
    %172 = arith.subf %160, %170 : vector<1x128xf32>
    %173 = arith.fptosi %165 : vector<1x128xf32> to vector<1x128xi32>
    %174 = arith.fptosi %170 : vector<1x128xf32> to vector<1x128xi32>
    %175 = tpu.iota {dimensions = array<i32: 0>} : vector<32x128xi32>
    %176 = vector.broadcast %173 : vector<1x128xi32> to vector<32x128xi32>
    %177 = arith.cmpi eq, %175, %176 : vector<32x128xi32>
    %cst_46 = arith.constant 1.000000e+00 : f32
    %178 = vector.broadcast %cst_46 : f32 to vector<1x128xf32>
    %179 = arith.subf %178, %171 : vector<1x128xf32>
    %c1_i32_47 = arith.constant 1 : i32
    %180 = vector.broadcast %c1_i32_47 : i32 to vector<1x128xi32>
    %181 = arith.addi %173, %180 : vector<1x128xi32>
    %182 = vector.broadcast %181 : vector<1x128xi32> to vector<32x128xi32>
    %183 = arith.cmpi eq, %175, %182 : vector<32x128xi32>
    %cst_48 = arith.constant 0.000000e+00 : f32
    %184 = vector.shape_cast %171 : vector<1x128xf32> to vector<1x128xf32>
    %185 = vector.broadcast %184 : vector<1x128xf32> to vector<32x128xf32>
    %186 = vector.broadcast %cst_48 : f32 to vector<32x128xf32>
    %187 = arith.select %183, %185, %186 : vector<32x128xi1>, vector<32x128xf32>
    %188 = vector.shape_cast %179 : vector<1x128xf32> to vector<1x128xf32>
    %189 = vector.broadcast %188 : vector<1x128xf32> to vector<32x128xf32>
    %190 = arith.select %177, %189, %187 : vector<32x128xi1>, vector<32x128xf32>
    %191 = vector.broadcast %174 : vector<1x128xi32> to vector<32x128xi32>
    %192 = arith.cmpi eq, %175, %191 : vector<32x128xi32>
    %cst_49 = arith.constant 1.000000e+00 : f32
    %193 = vector.broadcast %cst_49 : f32 to vector<1x128xf32>
    %194 = arith.subf %193, %172 : vector<1x128xf32>
    %c1_i32_50 = arith.constant 1 : i32
    %195 = vector.broadcast %c1_i32_50 : i32 to vector<1x128xi32>
    %196 = arith.addi %174, %195 : vector<1x128xi32>
    %197 = vector.broadcast %196 : vector<1x128xi32> to vector<32x128xi32>
    %198 = arith.cmpi eq, %175, %197 : vector<32x128xi32>
    %cst_51 = arith.constant 0.000000e+00 : f32
    %199 = vector.shape_cast %172 : vector<1x128xf32> to vector<1x128xf32>
    %200 = vector.broadcast %199 : vector<1x128xf32> to vector<32x128xf32>
    %201 = vector.broadcast %cst_51 : f32 to vector<32x128xf32>
    %202 = arith.select %198, %200, %201 : vector<32x128xi1>, vector<32x128xf32>
    %203 = vector.shape_cast %194 : vector<1x128xf32> to vector<1x128xf32>
    %204 = vector.broadcast %203 : vector<1x128xf32> to vector<32x128xf32>
    %205 = arith.select %192, %204, %202 : vector<32x128xi1>, vector<32x128xf32>
    %206 = tpu.concatenate %43, %92, %141, %190 in 0 : vector<8x128xf32>, vector<8x128xf32>, vector<16x128xf32>, vector<32x128xf32> -> vector<64x128xf32>
    %c0_52 = arith.constant 0 : index
    %c0_53 = arith.constant 0 : index
    %207 = vector.load %arg2[%c0_52, %c0_53] : memref<128x64xf32, #tpu.memory_space<vmem>>, vector<128x64xf32>
    %cst_54 = arith.constant dense<0.000000e+00> : vector<128x128xf32>
    %208 = tpu.matmul %207, %206, %cst_54 {dimension_numbers = #tpu.dot_dimension_numbers<[1], [0], [0], [1], [0, 0, 1, 1], [], []>, precision = #tpu.contract_precision<fp32>} : vector<128x64xf32>, vector<64x128xf32>, vector<128x128xf32> -> vector<128x128xf32>
    %209 = vector.extract_strided_slice %208 {offsets = [0, 0], sizes = [8, 128], strides = [1, 1]} : vector<128x128xf32> to vector<8x128xf32>
    %210 = arith.mulf %209, %58 : vector<8x128xf32>
    %cst_55 = arith.constant dense<0.000000e+00> : vector<128xf32>
    %211 = vector.multi_reduction <add>, %210, %cst_55 [0] : vector<8x128xf32> to vector<128xf32>
    %212 = vector.shape_cast %211 : vector<128xf32> to vector<1x128xf32>
    %c0_56 = arith.constant 0 : index
    %c0_57 = arith.constant 0 : index
    %213 = vector.load %arg3[%c0_56, %c0_57] : memref<8x128xf32, #tpu.memory_space<vmem>>, vector<1x128xf32>
    tpu.vector_store %arg3[%c0_56, %c0_57], %212 {strides = array<i32>} : memref<8x128xf32, #tpu.memory_space<vmem>>, vector<1x128xf32>,
    %214 = vector.extract_strided_slice %208 {offsets = [8, 0], sizes = [8, 128], strides = [1, 1]} : vector<128x128xf32> to vector<8x128xf32>
    %215 = arith.mulf %214, %58 : vector<8x128xf32>
    %cst_58 = arith.constant dense<0.000000e+00> : vector<128xf32>
    %216 = vector.multi_reduction <add>, %215, %cst_58 [0] : vector<8x128xf32> to vector<128xf32>
    %217 = vector.shape_cast %216 : vector<128xf32> to vector<1x128xf32>
    %c1_59 = arith.constant 1 : index
    %c0_60 = arith.constant 0 : index
    %218 = vector.load %arg3[%c1_59, %c0_60] : memref<8x128xf32, #tpu.memory_space<vmem>>, vector<1x128xf32>
    tpu.vector_store %arg3[%c1_59, %c0_60], %217 {strides = array<i32>} : memref<8x128xf32, #tpu.memory_space<vmem>>, vector<1x128xf32>,
    %219 = vector.extract_strided_slice %208 {offsets = [16, 0], sizes = [8, 128], strides = [1, 1]} : vector<128x128xf32> to vector<8x128xf32>
    %220 = arith.mulf %219, %107 : vector<8x128xf32>
    %cst_61 = arith.constant dense<0.000000e+00> : vector<128xf32>
    %221 = vector.multi_reduction <add>, %220, %cst_61 [0] : vector<8x128xf32> to vector<128xf32>
    %222 = vector.shape_cast %221 : vector<128xf32> to vector<1x128xf32>
    %c2 = arith.constant 2 : index
    %c0_62 = arith.constant 0 : index
    %223 = vector.load %arg3[%c2, %c0_62] : memref<8x128xf32, #tpu.memory_space<vmem>>, vector<1x128xf32>
    tpu.vector_store %arg3[%c2, %c0_62], %222 {strides = array<i32>} : memref<8x128xf32, #tpu.memory_space<vmem>>, vector<1x128xf32>,
    %224 = vector.extract_strided_slice %208 {offsets = [24, 0], sizes = [8, 128], strides = [1, 1]} : vector<128x128xf32> to vector<8x128xf32>
    %225 = arith.mulf %224, %107 : vector<8x128xf32>
    %cst_63 = arith.constant dense<0.000000e+00> : vector<128xf32>
    %226 = vector.multi_reduction <add>, %225, %cst_63 [0] : vector<8x128xf32> to vector<128xf32>
    %227 = vector.shape_cast %226 : vector<128xf32> to vector<1x128xf32>
    %c3 = arith.constant 3 : index
    %c0_64 = arith.constant 0 : index
    %228 = vector.load %arg3[%c3, %c0_64] : memref<8x128xf32, #tpu.memory_space<vmem>>, vector<1x128xf32>
    tpu.vector_store %arg3[%c3, %c0_64], %227 {strides = array<i32>} : memref<8x128xf32, #tpu.memory_space<vmem>>, vector<1x128xf32>,
    %229 = vector.extract_strided_slice %208 {offsets = [32, 0], sizes = [16, 128], strides = [1, 1]} : vector<128x128xf32> to vector<16x128xf32>
    %230 = arith.mulf %229, %156 : vector<16x128xf32>
    %cst_65 = arith.constant dense<0.000000e+00> : vector<128xf32>
    %231 = vector.multi_reduction <add>, %230, %cst_65 [0] : vector<16x128xf32> to vector<128xf32>
    %232 = vector.shape_cast %231 : vector<128xf32> to vector<1x128xf32>
    %c4 = arith.constant 4 : index
    %c0_66 = arith.constant 0 : index
    %233 = vector.load %arg3[%c4, %c0_66] : memref<8x128xf32, #tpu.memory_space<vmem>>, vector<1x128xf32>
    tpu.vector_store %arg3[%c4, %c0_66], %232 {strides = array<i32>} : memref<8x128xf32, #tpu.memory_space<vmem>>, vector<1x128xf32>,
    %234 = vector.extract_strided_slice %208 {offsets = [48, 0], sizes = [16, 128], strides = [1, 1]} : vector<128x128xf32> to vector<16x128xf32>
    %235 = arith.mulf %234, %156 : vector<16x128xf32>
    %cst_67 = arith.constant dense<0.000000e+00> : vector<128xf32>
    %236 = vector.multi_reduction <add>, %235, %cst_67 [0] : vector<16x128xf32> to vector<128xf32>
    %237 = vector.shape_cast %236 : vector<128xf32> to vector<1x128xf32>
    %c5 = arith.constant 5 : index
    %c0_68 = arith.constant 0 : index
    %238 = vector.load %arg3[%c5, %c0_68] : memref<8x128xf32, #tpu.memory_space<vmem>>, vector<1x128xf32>
    tpu.vector_store %arg3[%c5, %c0_68], %237 {strides = array<i32>} : memref<8x128xf32, #tpu.memory_space<vmem>>, vector<1x128xf32>,
    %239 = vector.extract_strided_slice %208 {offsets = [64, 0], sizes = [32, 128], strides = [1, 1]} : vector<128x128xf32> to vector<32x128xf32>
    %240 = arith.mulf %239, %205 : vector<32x128xf32>
    %cst_69 = arith.constant dense<0.000000e+00> : vector<128xf32>
    %241 = vector.multi_reduction <add>, %240, %cst_69 [0] : vector<32x128xf32> to vector<128xf32>
    %242 = vector.shape_cast %241 : vector<128xf32> to vector<1x128xf32>
    %c6 = arith.constant 6 : index
    %c0_70 = arith.constant 0 : index
    %243 = vector.load %arg3[%c6, %c0_70] : memref<8x128xf32, #tpu.memory_space<vmem>>, vector<1x128xf32>
    tpu.vector_store %arg3[%c6, %c0_70], %242 {strides = array<i32>} : memref<8x128xf32, #tpu.memory_space<vmem>>, vector<1x128xf32>,
    %244 = vector.extract_strided_slice %208 {offsets = [96, 0], sizes = [32, 128], strides = [1, 1]} : vector<128x128xf32> to vector<32x128xf32>
    %245 = arith.mulf %244, %205 : vector<32x128xf32>
    %cst_71 = arith.constant dense<0.000000e+00> : vector<128xf32>
    %246 = vector.multi_reduction <add>, %245, %cst_71 [0] : vector<32x128xf32> to vector<128xf32>
    %247 = vector.shape_cast %246 : vector<128xf32> to vector<1x128xf32>
    %c7 = arith.constant 7 : index
    %c0_72 = arith.constant 0 : index
    %248 = vector.load %arg3[%c7, %c0_72] : memref<8x128xf32, #tpu.memory_space<vmem>>, vector<1x128xf32>
    tpu.vector_store %arg3[%c7, %c0_72], %247 {strides = array<i32>} : memref<8x128xf32, #tpu.memory_space<vmem>>, vector<1x128xf32>,
    return
  }
  func.func @transform_0(%arg0: i32) -> (i32, i32) {
    %c0_i32 = arith.constant 0 : i32
    %c0_i32_0 = arith.constant 0 : i32
    return %c0_i32, %arg0 : i32, i32
  }
  func.func @transform_1(%arg0: i32) -> (i32, i32) {
    %c0_i32 = arith.constant 0 : i32
    %c0_i32_0 = arith.constant 0 : i32
    %c0_i32_1 = arith.constant 0 : i32
    return %c0_i32, %c0_i32_0 : i32, i32
  }
  func.func @transform_2(%arg0: i32) -> (i32, i32) {
    %c0_i32 = arith.constant 0 : i32
    %c0_i32_0 = arith.constant 0 : i32
    return %c0_i32, %arg0 : i32, i32
  }
}

</mosaic_0001>

<llo_original>
// kernel: tpu_custom_call.1
$region0: #{tpu_custom_call.1}
  #allocation0 [shape = 'u32[]', space=smem, size = 0x4, offset = 0x4, fixed_abs, tag = 'smem constant byte address 0x4 - core index']
  #allocation1 [shape = 'u32[72,128]{1,0:T(1,128)}', space=vmem, size = 0x9000, scoped, tag = 'internal scratch']
  %s0 = inlined_call_operand.vmem [shape: f32[2,128], index: 0, kind: input, shape index: {}]
  %s1 = inlined_call_operand.vmem [shape: f32[128,64], index: 1, kind: input, shape index: {}]
  %s2 = inlined_call_operand.hbm [shape: f32[8,128], index: 2, kind: output, shape index: {}]
  %s3 = sld [smem:[#allocation0]]
  $region18: #{tpu_custom_call.1} parent=0
    _
  %s5 = ssub.s32 1, %s3
  %s6 = scalar_select 0, %s5, %s3
  $region1: #{tpu_custom_call.1} parent=0
    #allocation2 [shape = 'u8[4096]{0}', space=vmem, size = 0x1000, scoped, tag = 'output window, operand 0, single buffered']
    #allocation3 [shape = 's32[1]{0}', space=sflag, size = 0x4, scoped, tag = 'scoped memory for tpu_custom_call.1']
    %7 = vsyncpa [#allocation3], 0
    // Predicated region
    $region2: #{tpu_custom_call.1} parent=1 // pred_check
      _
    $region3: #{tpu_custom_call.1} parent=1 // pred_check_branch
      %9 = sbr.rel (0) target = $region5
    $region4: #{tpu_custom_call.1} parent=1 // pred_region
      _
    $region5: #{tpu_custom_call.1} parent=1 // pred_fallthru
      _
    // Predicated region
    $region6: #{tpu_custom_call.1} parent=1 // pred_check
      _
    $region7: #{tpu_custom_call.1} parent=1 // pred_check_branch
      %11 = sbr.rel (0) target = $region9
    $region8: #{tpu_custom_call.1} parent=1 // pred_region
      _
    $region9: #{tpu_custom_call.1} parent=1 // pred_fallthru
      _
    %v12 = vld [vmem:[%s0] sm:$0x1]
    %v13 = vmax.f32 %v12, 0.0
    %v14 = vmin.f32 %v13, 1.0
    %v15 = vld [vmem:[%s0 + $0x1] sm:$0x1]
    %v16 = vmax.f32 %v15, 0.0
    %v17 = vmin.f32 %v16, 1.0
    %v18 = vmul.f32 %v14, 3.0
    %v19 = vmul.f32 %v17, 3.0
    %v20 = vfloor.f32 %v18
    %v21 = vmax.f32 %v20, 0.0
    %v22 = vmin.f32 %v21, 2.0
    %v23 = vfloor.f32 %v19
    %v24 = vmax.f32 %v23, 0.0
    %v25 = vmin.f32 %v24, 2.0
    %v26 = vsub.f32 %v18, %v22
    %v27 = vsub.f32 %v19, %v25
    %v28 = vcvt.f32.s32.to.zero.pseudo %v22
    %v29 = vcvt.f32.s32.to.zero.pseudo %v25
    %v30 = vlaneseq
    %v31 = vshrl.u32 %v30, 7
    %v32 = vperm.slane %v28, 0
    %vm33 = vcmp.eq.s32.totalorder %v31, %v32
    %v34 = vsub.f32 1.0, %v26
    %v35 = vadd.s32 %v28, 1
    %v36 = vperm.slane %v35, 0
    %vm37 = vcmp.eq.s32.totalorder %v31, %v36
    %v38 = vperm.slane %v26, 0
    %v39 = vsel %vm37, %v38, 0.0
    %v40 = vperm.slane %v34, 0
    %v41 = vsel %vm33, %v40, %v39
    %v42 = vperm.slane %v29, 0
    %vm43 = vcmp.eq.s32.totalorder %v31, %v42
    %v44 = vsub.f32 1.0, %v27
    %v45 = vadd.s32 %v29, 1
    %v46 = vperm.slane %v45, 0
    %vm47 = vcmp.eq.s32.totalorder %v31, %v46
    %v48 = vperm.slane %v27, 0
    %v49 = vsel %vm47, %v48, 0.0
    %v50 = vperm.slane %v44, 0
    %v51 = vsel %vm43, %v50, %v49
    %v52 = vmul.f32 %v14, 7.0
    %v53 = vmul.f32 %v17, 7.0
    %v54 = vfloor.f32 %v52
    %v55 = vmax.f32 %v54, 0.0
    %v56 = vmin.f32 %v55, 6.0
    %v57 = vfloor.f32 %v53
    %v58 = vmax.f32 %v57, 0.0
    %v59 = vmin.f32 %v58, 6.0
    %v60 = vsub.f32 %v52, %v56
    %v61 = vsub.f32 %v53, %v59
    %v62 = vcvt.f32.s32.to.zero.pseudo %v56
    %v63 = vcvt.f32.s32.to.zero.pseudo %v59
    %v64 = vperm.slane %v62, 0
    %vm65 = vcmp.eq.s32.totalorder %v31, %v64
    %v66 = vsub.f32 1.0, %v60
    %v67 = vadd.s32 %v62, 1
    %v68 = vperm.slane %v67, 0
    %vm69 = vcmp.eq.s32.totalorder %v31, %v68
    %v70 = vperm.slane %v60, 0
    %v71 = vsel %vm69, %v70, 0.0
    %v72 = vperm.slane %v66, 0
    %v73 = vsel %vm65, %v72, %v71
    %v74 = vperm.slane %v63, 0
    %vm75 = vcmp.eq.s32.totalorder %v31, %v74
    %v76 = vsub.f32 1.0, %v61
    %v77 = vadd.s32 %v63, 1
    %v78 = vperm.slane %v77, 0
    %vm79 = vcmp.eq.s32.totalorder %v31, %v78
    %v80 = vperm.slane %v61, 0
    %v81 = vsel %vm79, %v80, 0.0
    %v82 = vperm.slane %v76, 0
    %v83 = vsel %vm75, %v82, %v81
    %v84 = vmul.f32 %v14, 15.0
    %v85 = vmul.f32 %v17, 15.0
    %v86 = vfloor.f32 %v84
    %v87 = vmax.f32 %v86, 0.0
    %v88 = vmin.f32 %v87, 14.0
    %v89 = vfloor.f32 %v85
    %v90 = vmax.f32 %v89, 0.0
    %v91 = vmin.f32 %v90, 14.0
    %v92 = vsub.f32 %v84, %v88
    %v93 = vsub.f32 %v85, %v91
    %v94 = vcvt.f32.s32.to.zero.pseudo %v88
    %v95 = vcvt.f32.s32.to.zero.pseudo %v91
    %v96 = vadd.s32 %v31, 8
    %v97 = vperm.slane %v94, 0
    %vm98 = vcmp.eq.s32.totalorder %v31, %v97
    %vm99 = vcmp.eq.s32.totalorder %v96, %v97
    %v100 = vsub.f32 1.0, %v92
    %v101 = vadd.s32 %v94, 1
    %v102 = vperm.slane %v101, 0
    %vm103 = vcmp.eq.s32.totalorder %v31, %v102
    %vm104 = vcmp.eq.s32.totalorder %v96, %v102
    %v105 = vperm.slane %v92, 0
    %v106 = vsel %vm103, %v105, 0.0
    %v107 = vsel %vm104, %v105, 0.0
    %v108 = vperm.slane %v100, 0
    %v109 = vsel %vm98, %v108, %v106
    %v110 = vsel %vm99, %v108, %v107
    %v111 = vperm.slane %v95, 0
    %vm112 = vcmp.eq.s32.totalorder %v31, %v111
    %vm113 = vcmp.eq.s32.totalorder %v96, %v111
    %v114 = vsub.f32 1.0, %v93
    %v115 = vadd.s32 %v95, 1
    %v116 = vperm.slane %v115, 0
    %vm117 = vcmp.eq.s32.totalorder %v31, %v116
    %vm118 = vcmp.eq.s32.totalorder %v96, %v116
    %v119 = vperm.slane %v93, 0
    %v120 = vsel %vm117, %v119, 0.0
    %v121 = vsel %vm118, %v119, 0.0
    %v122 = vperm.slane %v114, 0
    %v123 = vsel %vm112, %v122, %v120
    %v124 = vsel %vm113, %v122, %v121
    %v125 = vmul.f32 %v14, 31.0
    %v126 = vmul.f32 %v17, 31.0
    %v127 = vfloor.f32 %v125
    %v128 = vmax.f32 %v127, 0.0
    %v129 = vmin.f32 %v128, 30.0
    %v130 = vfloor.f32 %v126
    %v131 = vmax.f32 %v130, 0.0
    %v132 = vmin.f32 %v131, 30.0
    %v133 = vsub.f32 %v125, %v129
    %v134 = vsub.f32 %v126, %v132
    %v135 = vcvt.f32.s32.to.zero.pseudo %v129
    %v136 = vcvt.f32.s32.to.zero.pseudo %v132
    %v137 = vadd.s32 %v31, 16
    %v138 = vadd.s32 %v31, 24
    %v139 = vperm.slane %v135, 0
    %vm140 = vcmp.eq.s32.totalorder %v31, %v139
    %vm141 = vcmp.eq.s32.totalorder %v96, %v139
    %vm142 = vcmp.eq.s32.totalorder %v137, %v139
    %vm143 = vcmp.eq.s32.totalorder %v138, %v139
    %v144 = vsub.f32 1.0, %v133
    %v145 = vadd.s32 %v135, 1
    %v146 = vperm.slane %v145, 0
    %vm147 = vcmp.eq.s32.totalorder %v31, %v146
    %vm148 = vcmp.eq.s32.totalorder %v96, %v146
    %vm149 = vcmp.eq.s32.totalorder %v137, %v146
    %vm150 = vcmp.eq.s32.totalorder %v138, %v146
    %v151 = vperm.slane %v133, 0
    %v152 = vsel %vm147, %v151, 0.0
    %v153 = vsel %vm148, %v151, 0.0
    %v154 = vsel %vm149, %v151, 0.0
    %v155 = vsel %vm150, %v151, 0.0
    %v156 = vperm.slane %v144, 0
    %v157 = vsel %vm140, %v156, %v152
    %v158 = vsel %vm141, %v156, %v153
    %v159 = vsel %vm142, %v156, %v154
    %v160 = vsel %vm143, %v156, %v155
    %v161 = vperm.slane %v136, 0
    %vm162 = vcmp.eq.s32.totalorder %v31, %v161
    %vm163 = vcmp.eq.s32.totalorder %v96, %v161
    %vm164 = vcmp.eq.s32.totalorder %v137, %v161
    %vm165 = vcmp.eq.s32.totalorder %v138, %v161
    %v166 = vsub.f32 1.0, %v134
    %v167 = vadd.s32 %v136, 1
    %v168 = vperm.slane %v167, 0
    %vm169 = vcmp.eq.s32.totalorder %v31, %v168
    %vm170 = vcmp.eq.s32.totalorder %v96, %v168
    %vm171 = vcmp.eq.s32.totalorder %v137, %v168
    %vm172 = vcmp.eq.s32.totalorder %v138, %v168
    %v173 = vperm.slane %v134, 0
    %v174 = vsel %vm169, %v173, 0.0
    %v175 = vsel %vm170, %v173, 0.0
    %v176 = vsel %vm171, %v173, 0.0
    %v177 = vsel %vm172, %v173, 0.0
    %v178 = vperm.slane %v166, 0
    %v179 = vsel %vm162, %v178, %v174
    %v180 = vsel %vm163, %v178, %v175
    %v181 = vsel %vm164, %v178, %v176
    %v182 = vsel %vm165, %v178, %v177
    %v183 = vld [vmem:[%s1] sm:$0xff]
    %v184 = vld [vmem:[%s1 + $0x8] sm:$0xff]
    %v185 = vld [vmem:[%s1 + $0x10] sm:$0xff]
    %v186 = vld [vmem:[%s1 + $0x18] sm:$0xff]
    %v187 = vld [vmem:[%s1 + $0x20] sm:$0xff]
    %v188 = vld [vmem:[%s1 + $0x28] sm:$0xff]
    %v189 = vld [vmem:[%s1 + $0x30] sm:$0xff]
    %v190 = vld [vmem:[%s1 + $0x38] sm:$0xff]
    %v191 = vld [vmem:[%s1 + $0x40] sm:$0xff]
    %v192 = vld [vmem:[%s1 + $0x48] sm:$0xff]
    %v193 = vld [vmem:[%s1 + $0x50] sm:$0xff]
    %v194 = vld [vmem:[%s1 + $0x58] sm:$0xff]
    %v195 = vld [vmem:[%s1 + $0x60] sm:$0xff]
    %v196 = vld [vmem:[%s1 + $0x68] sm:$0xff]
    %v197 = vld [vmem:[%s1 + $0x70] sm:$0xff]
    %v198 = vld [vmem:[%s1 + $0x78] sm:$0xff]
    %vm199 = vcmask 523264
    %v201 = vsel %vm199, %v183, 0
    %v204 = vsel %vm199, %v184, 0
    %v207 = vsel %vm199, %v185, 0
    %v210 = vsel %vm199, %v186, 0
    %v213 = vsel %vm199, %v187, 0
    %v216 = vsel %vm199, %v188, 0
    %v219 = vsel %vm199, %v189, 0
    %v222 = vsel %vm199, %v190, 0
    %v225 = vsel %vm199, %v191, 0
    %v228 = vsel %vm199, %v192, 0
    %v231 = vsel %vm199, %v193, 0
    %v234 = vsel %vm199, %v194, 0
    %v237 = vsel %vm199, %v195, 0
    %v240 = vsel %vm199, %v196, 0
    %v243 = vsel %vm199, %v197, 0
    %v246 = vsel %vm199, %v198, 0
    %248 = vmatpush.msra.mxu0 0.0
    %249 = vmatpush.msra.mxu0 0.0
    %250 = vmatpush.msra.mxu0 0.0
    %251 = vmatpush.msra.mxu0 0.0
    %252 = vmatpush.msra.mxu0 0.0
    %253 = vmatpush.msra.mxu0 0.0
    %254 = vmatpush.msra.mxu0 0.0
    %255 = vmatpush.msra.mxu0 0.0
    %v256 = vand.u32 %v160, 4294901760
    %257 = vmatpush.msra.mxu0 %v256
    %v258 = vand.u32 %v159, 4294901760
    %259 = vmatpush.msra.mxu0 %v258
    %v260 = vand.u32 %v158, 4294901760
    %261 = vmatpush.msra.mxu0 %v260
    %v262 = vand.u32 %v157, 4294901760
    %263 = vmatpush.msra.mxu0 %v262
    %v264 = vand.u32 %v110, 4294901760
    %265 = vmatpush.msra.mxu0 %v264
    %v266 = vand.u32 %v109, 4294901760
    %267 = vmatpush.msra.mxu0 %v266
    %v268 = vand.u32 %v73, 4294901760
    %269 = vmatpush.msra.mxu0 %v268
    %v270 = vand.u32 %v41, 4294901760
    %271 = vmatpush.msra.mxu0 %v270
    %v272 = vand.u32 %v201, 4294901760
    %v273 = vsub.f32 %v201, %v272
    %v274 = vand.u32 %v273, 4294901760
    %v275 = vsub.f32 %v273, %v274
    %v276 = vand.u32 %v275, 4294901760
    %277 = vmatmul.f32.gmra.mxu0 %v276
    %v278 = vpop.f32.mrf.mxu0
    %v279 = vadd.f32 0.0, %v278
    %v280 = vand.u32 %v204, 4294901760
    %v281 = vsub.f32 %v204, %v280
    %v282 = vand.u32 %v281, 4294901760
    %v283 = vsub.f32 %v281, %v282
    %v284 = vand.u32 %v283, 4294901760
    %285 = vmatmul.f32.gmra.mxu0 %v284
    %v286 = vpop.f32.mrf.mxu0
    %v287 = vadd.f32 0.0, %v286
    %v288 = vand.u32 %v207, 4294901760
    %v289 = vsub.f32 %v207, %v288
    %v290 = vand.u32 %v289, 4294901760
    %v291 = vsub.f32 %v289, %v290
    %v292 = vand.u32 %v291, 4294901760
    %293 = vmatmul.f32.gmra.mxu0 %v292
    %v294 = vpop.f32.mrf.mxu0
    %v295 = vadd.f32 0.0, %v294
    %v296 = vand.u32 %v210, 4294901760
    %v297 = vsub.f32 %v210, %v296
    %v298 = vand.u32 %v297, 4294901760
    %v299 = vsub.f32 %v297, %v298
    %v300 = vand.u32 %v299, 4294901760
    %301 = vmatmul.f32.gmra.mxu0 %v300
    %v302 = vpop.f32.mrf.mxu0
    %v303 = vadd.f32 0.0, %v302
    %v304 = vand.u32 %v213, 4294901760
    %v305 = vsub.f32 %v213, %v304
    %v306 = vand.u32 %v305, 4294901760
    %v307 = vsub.f32 %v305, %v306
    %v308 = vand.u32 %v307, 4294901760
    %309 = vmatmul.f32.gmra.mxu0 %v308
    %v310 = vpop.f32.mrf.mxu0
    %v311 = vadd.f32 0.0, %v310
    %v312 = vand.u32 %v216, 4294901760
    %v313 = vsub.f32 %v216, %v312
    %v314 = vand.u32 %v313, 4294901760
    %v315 = vsub.f32 %v313, %v314
    %v316 = vand.u32 %v315, 4294901760
    %317 = vmatmul.f32.gmra.mxu0 %v316
    %v318 = vpop.f32.mrf.mxu0
    %v319 = vadd.f32 0.0, %v318
    %v320 = vand.u32 %v219, 4294901760
    %v321 = vsub.f32 %v219, %v320
    %v322 = vand.u32 %v321, 4294901760
    %v323 = vsub.f32 %v321, %v322
    %v324 = vand.u32 %v323, 4294901760
    %325 = vmatmul.f32.gmra.mxu0 %v324
    %v326 = vpop.f32.mrf.mxu0
    %v327 = vadd.f32 0.0, %v326
    %v328 = vand.u32 %v222, 4294901760
    %v329 = vsub.f32 %v222, %v328
    %v330 = vand.u32 %v329, 4294901760
    %v331 = vsub.f32 %v329, %v330
    %v332 = vand.u32 %v331, 4294901760
    %333 = vmatmul.f32.gmra.mxu0 %v332
    %v334 = vpop.f32.mrf.mxu0
    %v335 = vadd.f32 0.0, %v334
    %v336 = vand.u32 %v225, 4294901760
    %v337 = vsub.f32 %v225, %v336
    %v338 = vand.u32 %v337, 4294901760
    %v339 = vsub.f32 %v337, %v338
    %v340 = vand.u32 %v339, 4294901760
    %341 = vmatmul.f32.gmra.mxu0 %v340
    %v342 = vpop.f32.mrf.mxu0
    %v343 = vadd.f32 0.0, %v342
    %v344 = vand.u32 %v228, 4294901760
    %v345 = vsub.f32 %v228, %v344
    %v346 = vand.u32 %v345, 4294901760
    %v347 = vsub.f32 %v345, %v346
    %v348 = vand.u32 %v347, 4294901760
    %349 = vmatmul.f32.gmra.mxu0 %v348
    %v350 = vpop.f32.mrf.mxu0
    %v351 = vadd.f32 0.0, %v350
    %v352 = vand.u32 %v231, 4294901760
    %v353 = vsub.f32 %v231, %v352
    %v354 = vand.u32 %v353, 4294901760
    %v355 = vsub.f32 %v353, %v354
    %v356 = vand.u32 %v355, 4294901760
    %357 = vmatmul.f32.gmra.mxu0 %v356
    %v358 = vpop.f32.mrf.mxu0
    %v359 = vadd.f32 0.0, %v358
    %v360 = vand.u32 %v234, 4294901760
    %v361 = vsub.f32 %v234, %v360
    %v362 = vand.u32 %v361, 4294901760
    %v363 = vsub.f32 %v361, %v362
    %v364 = vand.u32 %v363, 4294901760
    %365 = vmatmul.f32.gmra.mxu0 %v364
    %v366 = vpop.f32.mrf.mxu0
    %v367 = vadd.f32 0.0, %v366
    %v368 = vand.u32 %v237, 4294901760
    %v369 = vsub.f32 %v237, %v368
    %v370 = vand.u32 %v369, 4294901760
    %v371 = vsub.f32 %v369, %v370
    %v372 = vand.u32 %v371, 4294901760
    %373 = vmatmul.f32.gmra.mxu0 %v372
    %v374 = vpop.f32.mrf.mxu0
    %v375 = vadd.f32 0.0, %v374
    %v376 = vand.u32 %v240, 4294901760
    %v377 = vsub.f32 %v240, %v376
    %v378 = vand.u32 %v377, 4294901760
    %v379 = vsub.f32 %v377, %v378
    %v380 = vand.u32 %v379, 4294901760
    %381 = vmatmul.f32.gmra.mxu0 %v380
    %v382 = vpop.f32.mrf.mxu0
    %v383 = vadd.f32 0.0, %v382
    %v384 = vand.u32 %v243, 4294901760
    %v385 = vsub.f32 %v243, %v384
    %v386 = vand.u32 %v385, 4294901760
    %v387 = vsub.f32 %v385, %v386
    %v388 = vand.u32 %v387, 4294901760
    %389 = vmatmul.f32.gmra.mxu0 %v388
    %v390 = vpop.f32.mrf.mxu0
    %v391 = vadd.f32 0.0, %v390
    %v392 = vand.u32 %v246, 4294901760
    %v393 = vsub.f32 %v246, %v392
    %v394 = vand.u32 %v393, 4294901760
    %v395 = vsub.f32 %v393, %v394
    %v396 = vand.u32 %v395, 4294901760
    %397 = vmatmul.f32.gmra.mxu0 %v396
    %v398 = vpop.f32.mrf.mxu0
    %v399 = vadd.f32 0.0, %v398
    %400 = vdwg.mxu0
    %401 = vmatpush.msra.mxu0 0.0
    %402 = vmatpush.msra.mxu0 0.0
    %403 = vmatpush.msra.mxu0 0.0
    %404 = vmatpush.msra.mxu0 0.0
    %405 = vmatpush.msra.mxu0 0.0
    %406 = vmatpush.msra.mxu0 0.0
    %407 = vmatpush.msra.mxu0 0.0
    %408 = vmatpush.msra.mxu0 0.0
    %v409 = vand.u32 %v160, 4294901760
    %v410 = vsub.f32 %v160, %v409
    %v411 = vand.u32 %v410, 4294901760
    %v412 = vsub.f32 %v410, %v411
    %v413 = vand.u32 %v412, 4294901760
    %414 = vmatpush.msra.mxu0 %v413
    %v415 = vand.u32 %v159, 4294901760
    %v416 = vsub.f32 %v159, %v415
    %v417 = vand.u32 %v416, 4294901760
    %v418 = vsub.f32 %v416, %v417
    %v419 = vand.u32 %v418, 4294901760
    %420 = vmatpush.msra.mxu0 %v419
    %v421 = vand.u32 %v158, 4294901760
    %v422 = vsub.f32 %v158, %v421
    %v423 = vand.u32 %v422, 4294901760
    %v424 = vsub.f32 %v422, %v423
    %v425 = vand.u32 %v424, 4294901760
    %426 = vmatpush.msra.mxu0 %v425
    %v427 = vand.u32 %v157, 4294901760
    %v428 = vsub.f32 %v157, %v427
    %v429 = vand.u32 %v428, 4294901760
    %v430 = vsub.f32 %v428, %v429
    %v431 = vand.u32 %v430, 4294901760
    %432 = vmatpush.msra.mxu0 %v431
    %v433 = vand.u32 %v110, 4294901760
    %v434 = vsub.f32 %v110, %v433
    %v435 = vand.u32 %v434, 4294901760
    %v436 = vsub.f32 %v434, %v435
    %v437 = vand.u32 %v436, 4294901760
    %438 = vmatpush.msra.mxu0 %v437
    %v439 = vand.u32 %v109, 4294901760
    %v440 = vsub.f32 %v109, %v439
    %v441 = vand.u32 %v440, 4294901760
    %v442 = vsub.f32 %v440, %v441
    %v443 = vand.u32 %v442, 4294901760
    %444 = vmatpush.msra.mxu0 %v443
    %v445 = vand.u32 %v73, 4294901760
    %v446 = vsub.f32 %v73, %v445
    %v447 = vand.u32 %v446, 4294901760
    %v448 = vsub.f32 %v446, %v447
    %v449 = vand.u32 %v448, 4294901760
    %450 = vmatpush.msra.mxu0 %v449
    %v451 = vand.u32 %v41, 4294901760
    %v452 = vsub.f32 %v41, %v451
    %v453 = vand.u32 %v452, 4294901760
    %v454 = vsub.f32 %v452, %v453
    %v455 = vand.u32 %v454, 4294901760
    %456 = vmatpush.msra.mxu0 %v455
    %v457 = vand.u32 %v201, 4294901760
    %458 = vmatmul.f32.gmra.mxu0 %v457
    %v459 = vpop.f32.mrf.mxu0
    %v460 = vadd.f32 %v279, %v459
    %v461 = vand.u32 %v204, 4294901760
    %462 = vmatmul.f32.gmra.mxu0 %v461
    %v463 = vpop.f32.mrf.mxu0
    %v464 = vadd.f32 %v287, %v463
    %v465 = vand.u32 %v207, 4294901760
    %466 = vmatmul.f32.gmra.mxu0 %v465
    %v467 = vpop.f32.mrf.mxu0
    %v468 = vadd.f32 %v295, %v467
    %v469 = vand.u32 %v210, 4294901760
    %470 = vmatmul.f32.gmra.mxu0 %v469
    %v471 = vpop.f32.mrf.mxu0
    %v472 = vadd.f32 %v303, %v471
    %v473 = vand.u32 %v213, 4294901760
    %474 = vmatmul.f32.gmra.mxu0 %v473
    %v475 = vpop.f32.mrf.mxu0
    %v476 = vadd.f32 %v311, %v475
    %v477 = vand.u32 %v216, 4294901760
    %478 = vmatmul.f32.gmra.mxu0 %v477
    %v479 = vpop.f32.mrf.mxu0
    %v480 = vadd.f32 %v319, %v479
    %v481 = vand.u32 %v219, 4294901760
    %482 = vmatmul.f32.gmra.mxu0 %v481
    %v483 = vpop.f32.mrf.mxu0
    %v484 = vadd.f32 %v327, %v483
    %v485 = vand.u32 %v222, 4294901760
    %486 = vmatmul.f32.gmra.mxu0 %v485
    %v487 = vpop.f32.mrf.mxu0
    %v488 = vadd.f32 %v335, %v487
    %v489 = vand.u32 %v225, 4294901760
    %490 = vmatmul.f32.gmra.mxu0 %v489
    %v491 = vpop.f32.mrf.mxu0
    %v492 = vadd.f32 %v343, %v491
    %v493 = vand.u32 %v228, 4294901760
    %494 = vmatmul.f32.gmra.mxu0 %v493
    %v495 = vpop.f32.mrf.mxu0
    %v496 = vadd.f32 %v351, %v495
    %v497 = vand.u32 %v231, 4294901760
    %498 = vmatmul.f32.gmra.mxu0 %v497
    %v499 = vpop.f32.mrf.mxu0
    %v500 = vadd.f32 %v359, %v499
    %v501 = vand.u32 %v234, 4294901760
    %502 = vmatmul.f32.gmra.mxu0 %v501
    %v503 = vpop.f32.mrf.mxu0
    %v504 = vadd.f32 %v367, %v503
    %v505 = vand.u32 %v237, 4294901760
    %506 = vmatmul.f32.gmra.mxu0 %v505
    %v507 = vpop.f32.mrf.mxu0
    %v508 = vadd.f32 %v375, %v507
    %v509 = vand.u32 %v240, 4294901760
    %510 = vmatmul.f32.gmra.mxu0 %v509
    %v511 = vpop.f32.mrf.mxu0
    %v512 = vadd.f32 %v383, %v511
    %v513 = vand.u32 %v243, 4294901760
    %514 = vmatmul.f32.gmra.mxu0 %v513
    %v515 = vpop.f32.mrf.mxu0
    %v516 = vadd.f32 %v391, %v515
    %v517 = vand.u32 %v246, 4294901760
    %518 = vmatmul.f32.gmra.mxu0 %v517
    %v519 = vpop.f32.mrf.mxu0
    %v520 = vadd.f32 %v399, %v519
    %521 = vdwg.mxu0
    %522 = vmatpush.msra.mxu0 0.0
    %523 = vmatpush.msra.mxu0 0.0
    %524 = vmatpush.msra.mxu0 0.0
    %525 = vmatpush.msra.mxu0 0.0
    %526 = vmatpush.msra.mxu0 0.0
    %527 = vmatpush.msra.mxu0 0.0
    %528 = vmatpush.msra.mxu0 0.0
    %529 = vmatpush.msra.mxu0 0.0
    %v530 = vand.u32 %v160, 4294901760
    %v531 = vsub.f32 %v160, %v530
    %532 = vmatpush.msra.mxu0 %v531
    %v533 = vand.u32 %v159, 4294901760
    %v534 = vsub.f32 %v159, %v533
    %535 = vmatpush.msra.mxu0 %v534
    %v536 = vand.u32 %v158, 4294901760
    %v537 = vsub.f32 %v158, %v536
    %538 = vmatpush.msra.mxu0 %v537
    %v539 = vand.u32 %v157, 4294901760
    %v540 = vsub.f32 %v157, %v539
    %541 = vmatpush.msra.mxu0 %v540
    %v542 = vand.u32 %v110, 4294901760
    %v543 = vsub.f32 %v110, %v542
    %544 = vmatpush.msra.mxu0 %v543
    %v545 = vand.u32 %v109, 4294901760
    %v546 = vsub.f32 %v109, %v545
    %547 = vmatpush.msra.mxu0 %v546
    %v548 = vand.u32 %v73, 4294901760
    %v549 = vsub.f32 %v73, %v548
    %550 = vmatpush.msra.mxu0 %v549
    %v551 = vand.u32 %v41, 4294901760
    %v552 = vsub.f32 %v41, %v551
    %553 = vmatpush.msra.mxu0 %v552
    %v554 = vand.u32 %v201, 4294901760
    %v555 = vsub.f32 %v201, %v554
    %556 = vmatmul.f32.gmra.mxu0 %v555
    %v557 = vpop.f32.mrf.mxu0
    %v558 = vadd.f32 %v460, %v557
    %v559 = vand.u32 %v204, 4294901760
    %v560 = vsub.f32 %v204, %v559
    %561 = vmatmul.f32.gmra.mxu0 %v560
    %v562 = vpop.f32.mrf.mxu0
    %v563 = vadd.f32 %v464, %v562
    %v564 = vand.u32 %v207, 4294901760
    %v565 = vsub.f32 %v207, %v564
    %566 = vmatmul.f32.gmra.mxu0 %v565
    %v567 = vpop.f32.mrf.mxu0
    %v568 = vadd.f32 %v468, %v567
    %v569 = vand.u32 %v210, 4294901760
    %v570 = vsub.f32 %v210, %v569
    %571 = vmatmul.f32.gmra.mxu0 %v570
    %v572 = vpop.f32.mrf.mxu0
    %v573 = vadd.f32 %v472, %v572
    %v574 = vand.u32 %v213, 4294901760
    %v575 = vsub.f32 %v213, %v574
    %576 = vmatmul.f32.gmra.mxu0 %v575
    %v577 = vpop.f32.mrf.mxu0
    %v578 = vadd.f32 %v476, %v577
    %v579 = vand.u32 %v216, 4294901760
    %v580 = vsub.f32 %v216, %v579
    %581 = vmatmul.f32.gmra.mxu0 %v580
    %v582 = vpop.f32.mrf.mxu0
    %v583 = vadd.f32 %v480, %v582
    %v584 = vand.u32 %v219, 4294901760
    %v585 = vsub.f32 %v219, %v584
    %586 = vmatmul.f32.gmra.mxu0 %v585
    %v587 = vpop.f32.mrf.mxu0
    %v588 = vadd.f32 %v484, %v587
    %v589 = vand.u32 %v222, 4294901760
    %v590 = vsub.f32 %v222, %v589
    %591 = vmatmul.f32.gmra.mxu0 %v590
    %v592 = vpop.f32.mrf.mxu0
    %v593 = vadd.f32 %v488, %v592
    %v594 = vand.u32 %v225, 4294901760
    %v595 = vsub.f32 %v225, %v594
    %596 = vmatmul.f32.gmra.mxu0 %v595
    %v597 = vpop.f32.mrf.mxu0
    %v598 = vadd.f32 %v492, %v597
    %v599 = vand.u32 %v228, 4294901760
    %v600 = vsub.f32 %v228, %v599
    %601 = vmatmul.f32.gmra.mxu0 %v600
    %v602 = vpop.f32.mrf.mxu0
    %v603 = vadd.f32 %v496, %v602
    %v604 = vand.u32 %v231, 4294901760
    %v605 = vsub.f32 %v231, %v604
    %606 = vmatmul.f32.gmra.mxu0 %v605
    %v607 = vpop.f32.mrf.mxu0
    %v608 = vadd.f32 %v500, %v607
    %v609 = vand.u32 %v234, 4294901760
    %v610 = vsub.f32 %v234, %v609
    %611 = vmatmul.f32.gmra.mxu0 %v610
    %v612 = vpop.f32.mrf.mxu0
    %v613 = vadd.f32 %v504, %v612
    %v614 = vand.u32 %v237, 4294901760
    %v615 = vsub.f32 %v237, %v614
    %616 = vmatmul.f32.gmra.mxu0 %v615
    %v617 = vpop.f32.mrf.mxu0
    %v618 = vadd.f32 %v508, %v617
    %v619 = vand.u32 %v240, 4294901760
    %v620 = vsub.f32 %v240, %v619
    %621 = vmatmul.f32.gmra.mxu0 %v620
    %v622 = vpop.f32.mrf.mxu0
    %v623 = vadd.f32 %v512, %v622
    %v624 = vand.u32 %v243, 4294901760
    %v625 = vsub.f32 %v243, %v624
    %626 = vmatmul.f32.gmra.mxu0 %v625
    %v627 = vpop.f32.mrf.mxu0
    %v628 = vadd.f32 %v516, %v627
    %v629 = vand.u32 %v246, 4294901760
    %v630 = vsub.f32 %v246, %v629
    %631 = vmatmul.f32.gmra.mxu0 %v630
    %v632 = vpop.f32.mrf.mxu0
    %v633 = vadd.f32 %v520, %v632
    %634 = vdwg.mxu0
    %635 = vmatpush.msra.mxu0 0.0
    %636 = vmatpush.msra.mxu0 0.0
    %637 = vmatpush.msra.mxu0 0.0
    %638 = vmatpush.msra.mxu0 0.0
    %639 = vmatpush.msra.mxu0 0.0
    %640 = vmatpush.msra.mxu0 0.0
    %641 = vmatpush.msra.mxu0 0.0
    %642 = vmatpush.msra.mxu0 0.0
    %v643 = vand.u32 %v160, 4294901760
    %644 = vmatpush.msra.mxu0 %v643
    %v645 = vand.u32 %v159, 4294901760
    %646 = vmatpush.msra.mxu0 %v645
    %v647 = vand.u32 %v158, 4294901760
    %648 = vmatpush.msra.mxu0 %v647
    %v649 = vand.u32 %v157, 4294901760
    %650 = vmatpush.msra.mxu0 %v649
    %v651 = vand.u32 %v110, 4294901760
    %652 = vmatpush.msra.mxu0 %v651
    %v653 = vand.u32 %v109, 4294901760
    %654 = vmatpush.msra.mxu0 %v653
    %v655 = vand.u32 %v73, 4294901760
    %656 = vmatpush.msra.mxu0 %v655
    %v657 = vand.u32 %v41, 4294901760
    %658 = vmatpush.msra.mxu0 %v657
    %v659 = vand.u32 %v201, 4294901760
    %v660 = vsub.f32 %v201, %v659
    %v661 = vand.u32 %v660, 4294901760
    %662 = vmatmul.f32.gmra.mxu0 %v661
    %v663 = vpop.f32.mrf.mxu0
    %v664 = vadd.f32 %v558, %v663
    %v665 = vand.u32 %v204, 4294901760
    %v666 = vsub.f32 %v204, %v665
    %v667 = vand.u32 %v666, 4294901760
    %668 = vmatmul.f32.gmra.mxu0 %v667
    %v669 = vpop.f32.mrf.mxu0
    %v670 = vadd.f32 %v563, %v669
    %v671 = vand.u32 %v207, 4294901760
    %v672 = vsub.f32 %v207, %v671
    %v673 = vand.u32 %v672, 4294901760
    %674 = vmatmul.f32.gmra.mxu0 %v673
    %v675 = vpop.f32.mrf.mxu0
    %v676 = vadd.f32 %v568, %v675
    %v677 = vand.u32 %v210, 4294901760
    %v678 = vsub.f32 %v210, %v677
    %v679 = vand.u32 %v678, 4294901760
    %680 = vmatmul.f32.gmra.mxu0 %v679
    %v681 = vpop.f32.mrf.mxu0
    %v682 = vadd.f32 %v573, %v681
    %v683 = vand.u32 %v213, 4294901760
    %v684 = vsub.f32 %v213, %v683
    %v685 = vand.u32 %v684, 4294901760
    %686 = vmatmul.f32.gmra.mxu0 %v685
    %v687 = vpop.f32.mrf.mxu0
    %v688 = vadd.f32 %v578, %v687
    %v689 = vand.u32 %v216, 4294901760
    %v690 = vsub.f32 %v216, %v689
    %v691 = vand.u32 %v690, 4294901760
    %692 = vmatmul.f32.gmra.mxu0 %v691
    %v693 = vpop.f32.mrf.mxu0
    %v694 = vadd.f32 %v583, %v693
    %v695 = vand.u32 %v219, 4294901760
    %v696 = vsub.f32 %v219, %v695
    %v697 = vand.u32 %v696, 4294901760
    %698 = vmatmul.f32.gmra.mxu0 %v697
    %v699 = vpop.f32.mrf.mxu0
    %v700 = vadd.f32 %v588, %v699
    %v701 = vand.u32 %v222, 4294901760
    %v702 = vsub.f32 %v222, %v701
    %v703 = vand.u32 %v702, 4294901760
    %704 = vmatmul.f32.gmra.mxu0 %v703
    %v705 = vpop.f32.mrf.mxu0
    %v706 = vadd.f32 %v593, %v705
    %v707 = vand.u32 %v225, 4294901760
    %v708 = vsub.f32 %v225, %v707
    %v709 = vand.u32 %v708, 4294901760
    %710 = vmatmul.f32.gmra.mxu0 %v709
    %v711 = vpop.f32.mrf.mxu0
    %v712 = vadd.f32 %v598, %v711
    %v713 = vand.u32 %v228, 4294901760
    %v714 = vsub.f32 %v228, %v713
    %v715 = vand.u32 %v714, 4294901760
    %716 = vmatmul.f32.gmra.mxu0 %v715
    %v717 = vpop.f32.mrf.mxu0
    %v718 = vadd.f32 %v603, %v717
    %v719 = vand.u32 %v231, 4294901760
    %v720 = vsub.f32 %v231, %v719
    %v721 = vand.u32 %v720, 4294901760
    %722 = vmatmul.f32.gmra.mxu0 %v721
    %v723 = vpop.f32.mrf.mxu0
    %v724 = vadd.f32 %v608, %v723
    %v725 = vand.u32 %v234, 4294901760
    %v726 = vsub.f32 %v234, %v725
    %v727 = vand.u32 %v726, 4294901760
    %728 = vmatmul.f32.gmra.mxu0 %v727
    %v729 = vpop.f32.mrf.mxu0
    %v730 = vadd.f32 %v613, %v729
    %v731 = vand.u32 %v237, 4294901760
    %v732 = vsub.f32 %v237, %v731
    %v733 = vand.u32 %v732, 4294901760
    %734 = vmatmul.f32.gmra.mxu0 %v733
    %v735 = vpop.f32.mrf.mxu0
    %v736 = vadd.f32 %v618, %v735
    %v737 = vand.u32 %v240, 4294901760
    %v738 = vsub.f32 %v240, %v737
    %v739 = vand.u32 %v738, 4294901760
    %740 = vmatmul.f32.gmra.mxu0 %v739
    %v741 = vpop.f32.mrf.mxu0
    %v742 = vadd.f32 %v623, %v741
    %v743 = vand.u32 %v243, 4294901760
    %v744 = vsub.f32 %v243, %v743
    %v745 = vand.u32 %v744, 4294901760
    %746 = vmatmul.f32.gmra.mxu0 %v745
    %v747 = vpop.f32.mrf.mxu0
    %v748 = vadd.f32 %v628, %v747
    %v749 = vand.u32 %v246, 4294901760
    %v750 = vsub.f32 %v246, %v749
    %v751 = vand.u32 %v750, 4294901760
    %752 = vmatmul.f32.gmra.mxu0 %v751
    %v753 = vpop.f32.mrf.mxu0
    %v754 = vadd.f32 %v633, %v753
    %755 = vdwg.mxu0
    %756 = vmatpush.msra.mxu0 0.0
    %757 = vmatpush.msra.mxu0 0.0
    %758 = vmatpush.msra.mxu0 0.0
    %759 = vmatpush.msra.mxu0 0.0
    %760 = vmatpush.msra.mxu0 0.0
    %761 = vmatpush.msra.mxu0 0.0
    %762 = vmatpush.msra.mxu0 0.0
    %763 = vmatpush.msra.mxu0 0.0
    %v764 = vand.u32 %v160, 4294901760
    %v765 = vsub.f32 %v160, %v764
    %v766 = vand.u32 %v765, 4294901760
    %767 = vmatpush.msra.mxu0 %v766
    %v768 = vand.u32 %v159, 4294901760
    %v769 = vsub.f32 %v159, %v768
    %v770 = vand.u32 %v769, 4294901760
    %771 = vmatpush.msra.mxu0 %v770
    %v772 = vand.u32 %v158, 4294901760
    %v773 = vsub.f32 %v158, %v772
    %v774 = vand.u32 %v773, 4294901760
    %775 = vmatpush.msra.mxu0 %v774
    %v776 = vand.u32 %v157, 4294901760
    %v777 = vsub.f32 %v157, %v776
    %v778 = vand.u32 %v777, 4294901760
    %779 = vmatpush.msra.mxu0 %v778
    %v780 = vand.u32 %v110, 4294901760
    %v781 = vsub.f32 %v110, %v780
    %v782 = vand.u32 %v781, 4294901760
    %783 = vmatpush.msra.mxu0 %v782
    %v784 = vand.u32 %v109, 4294901760
    %v785 = vsub.f32 %v109, %v784
    %v786 = vand.u32 %v785, 4294901760
    %787 = vmatpush.msra.mxu0 %v786
    %v788 = vand.u32 %v73, 4294901760
    %v789 = vsub.f32 %v73, %v788
    %v790 = vand.u32 %v789, 4294901760
    %791 = vmatpush.msra.mxu0 %v790
    %v792 = vand.u32 %v41, 4294901760
    %v793 = vsub.f32 %v41, %v792
    %v794 = vand.u32 %v793, 4294901760
    %795 = vmatpush.msra.mxu0 %v794
    %v796 = vand.u32 %v201, 4294901760
    %797 = vmatmul.f32.gmra.mxu0 %v796
    %v798 = vpop.f32.mrf.mxu0
    %v799 = vadd.f32 %v664, %v798
    %v800 = vand.u32 %v204, 4294901760
    %801 = vmatmul.f32.gmra.mxu0 %v800
    %v802 = vpop.f32.mrf.mxu0
    %v803 = vadd.f32 %v670, %v802
    %v804 = vand.u32 %v207, 4294901760
    %805 = vmatmul.f32.gmra.mxu0 %v804
    %v806 = vpop.f32.mrf.mxu0
    %v807 = vadd.f32 %v676, %v806
    %v808 = vand.u32 %v210, 4294901760
    %809 = vmatmul.f32.gmra.mxu0 %v808
    %v810 = vpop.f32.mrf.mxu0
    %v811 = vadd.f32 %v682, %v810
    %v812 = vand.u32 %v213, 4294901760
    %813 = vmatmul.f32.gmra.mxu0 %v812
    %v814 = vpop.f32.mrf.mxu0
    %v815 = vadd.f32 %v688, %v814
    %v816 = vand.u32 %v216, 4294901760
    %817 = vmatmul.f32.gmra.mxu0 %v816
    %v818 = vpop.f32.mrf.mxu0
    %v819 = vadd.f32 %v694, %v818
    %v820 = vand.u32 %v219, 4294901760
    %821 = vmatmul.f32.gmra.mxu0 %v820
    %v822 = vpop.f32.mrf.mxu0
    %v823 = vadd.f32 %v700, %v822
    %v824 = vand.u32 %v222, 4294901760
    %825 = vmatmul.f32.gmra.mxu0 %v824
    %v826 = vpop.f32.mrf.mxu0
    %v827 = vadd.f32 %v706, %v826
    %v828 = vand.u32 %v225, 4294901760
    %829 = vmatmul.f32.gmra.mxu0 %v828
    %v830 = vpop.f32.mrf.mxu0
    %v831 = vadd.f32 %v712, %v830
    %v832 = vand.u32 %v228, 4294901760
    %833 = vmatmul.f32.gmra.mxu0 %v832
    %v834 = vpop.f32.mrf.mxu0
    %v835 = vadd.f32 %v718, %v834
    %v836 = vand.u32 %v231, 4294901760
    %837 = vmatmul.f32.gmra.mxu0 %v836
    %v838 = vpop.f32.mrf.mxu0
    %v839 = vadd.f32 %v724, %v838
    %v840 = vand.u32 %v234, 4294901760
    %841 = vmatmul.f32.gmra.mxu0 %v840
    %v842 = vpop.f32.mrf.mxu0
    %v843 = vadd.f32 %v730, %v842
    %v844 = vand.u32 %v237, 4294901760
    %845 = vmatmul.f32.gmra.mxu0 %v844
    %v846 = vpop.f32.mrf.mxu0
    %v847 = vadd.f32 %v736, %v846
    %v848 = vand.u32 %v240, 4294901760
    %849 = vmatmul.f32.gmra.mxu0 %v848
    %v850 = vpop.f32.mrf.mxu0
    %v851 = vadd.f32 %v742, %v850
    %v852 = vand.u32 %v243, 4294901760
    %853 = vmatmul.f32.gmra.mxu0 %v852
    %v854 = vpop.f32.mrf.mxu0
    %v855 = vadd.f32 %v748, %v854
    %v856 = vand.u32 %v246, 4294901760
    %857 = vmatmul.f32.gmra.mxu0 %v856
    %v858 = vpop.f32.mrf.mxu0
    %v859 = vadd.f32 %v754, %v858
    %860 = vdwg.mxu0
    %861 = vmatpush.msra.mxu0 0.0
    %862 = vmatpush.msra.mxu0 0.0
    %863 = vmatpush.msra.mxu0 0.0
    %864 = vmatpush.msra.mxu0 0.0
    %865 = vmatpush.msra.mxu0 0.0
    %866 = vmatpush.msra.mxu0 0.0
    %867 = vmatpush.msra.mxu0 0.0
    %868 = vmatpush.msra.mxu0 0.0
    %v869 = vand.u32 %v160, 4294901760
    %870 = vmatpush.msra.mxu0 %v869
    %v871 = vand.u32 %v159, 4294901760
    %872 = vmatpush.msra.mxu0 %v871
    %v873 = vand.u32 %v158, 4294901760
    %874 = vmatpush.msra.mxu0 %v873
    %v875 = vand.u32 %v157, 4294901760
    %876 = vmatpush.msra.mxu0 %v875
    %v877 = vand.u32 %v110, 4294901760
    %878 = vmatpush.msra.mxu0 %v877
    %v879 = vand.u32 %v109, 4294901760
    %880 = vmatpush.msra.mxu0 %v879
    %v881 = vand.u32 %v73, 4294901760
    %882 = vmatpush.msra.mxu0 %v881
    %v883 = vand.u32 %v41, 4294901760
    %884 = vmatpush.msra.mxu0 %v883
    %v885 = vand.u32 %v201, 4294901760
    %886 = vmatmul.f32.gmra.mxu0 %v885
    %v887 = vpop.f32.mrf.mxu0
    %v888 = vadd.f32 %v799, %v887
    %v889 = vand.u32 %v204, 4294901760
    %890 = vmatmul.f32.gmra.mxu0 %v889
    %v891 = vpop.f32.mrf.mxu0
    %v892 = vadd.f32 %v803, %v891
    %v893 = vand.u32 %v207, 4294901760
    %894 = vmatmul.f32.gmra.mxu0 %v893
    %v895 = vpop.f32.mrf.mxu0
    %v896 = vadd.f32 %v807, %v895
    %v897 = vand.u32 %v210, 4294901760
    %898 = vmatmul.f32.gmra.mxu0 %v897
    %v899 = vpop.f32.mrf.mxu0
    %v900 = vadd.f32 %v811, %v899
    %v901 = vand.u32 %v213, 4294901760
    %902 = vmatmul.f32.gmra.mxu0 %v901
    %v903 = vpop.f32.mrf.mxu0
    %v904 = vadd.f32 %v815, %v903
    %v905 = vand.u32 %v216, 4294901760
    %906 = vmatmul.f32.gmra.mxu0 %v905
    %v907 = vpop.f32.mrf.mxu0
    %v908 = vadd.f32 %v819, %v907
    %v909 = vand.u32 %v219, 4294901760
    %910 = vmatmul.f32.gmra.mxu0 %v909
    %v911 = vpop.f32.mrf.mxu0
    %v912 = vadd.f32 %v823, %v911
    %v913 = vand.u32 %v222, 4294901760
    %914 = vmatmul.f32.gmra.mxu0 %v913
    %v915 = vpop.f32.mrf.mxu0
    %v916 = vadd.f32 %v827, %v915
    %v917 = vand.u32 %v225, 4294901760
    %918 = vmatmul.f32.gmra.mxu0 %v917
    %v919 = vpop.f32.mrf.mxu0
    %v920 = vadd.f32 %v831, %v919
    %v921 = vand.u32 %v228, 4294901760
    %922 = vmatmul.f32.gmra.mxu0 %v921
    %v923 = vpop.f32.mrf.mxu0
    %v924 = vadd.f32 %v835, %v923
    %v925 = vand.u32 %v231, 4294901760
    %926 = vmatmul.f32.gmra.mxu0 %v925
    %v927 = vpop.f32.mrf.mxu0
    %v928 = vadd.f32 %v839, %v927
    %v929 = vand.u32 %v234, 4294901760
    %930 = vmatmul.f32.gmra.mxu0 %v929
    %v931 = vpop.f32.mrf.mxu0
    %v932 = vadd.f32 %v843, %v931
    %v933 = vand.u32 %v237, 4294901760
    %934 = vmatmul.f32.gmra.mxu0 %v933
    %v935 = vpop.f32.mrf.mxu0
    %v936 = vadd.f32 %v847, %v935
    %v937 = vand.u32 %v240, 4294901760
    %938 = vmatmul.f32.gmra.mxu0 %v937
    %v939 = vpop.f32.mrf.mxu0
    %v940 = vadd.f32 %v851, %v939
    %v941 = vand.u32 %v243, 4294901760
    %942 = vmatmul.f32.gmra.mxu0 %v941
    %v943 = vpop.f32.mrf.mxu0
    %v944 = vadd.f32 %v855, %v943
    %v945 = vand.u32 %v246, 4294901760
    %946 = vmatmul.f32.gmra.mxu0 %v945
    %v947 = vpop.f32.mrf.mxu0
    %v948 = vadd.f32 %v859, %v947
    %949 = vdwg.mxu0
    %v950 = vmul.f32 %v888, %v51
    %v951 = vrot.slane %v950, 4
    %v952 = vadd.f32 %v950, %v951
    %v953 = vrot.slane %v952, 2
    %v954 = vadd.f32 %v952, %v953
    %v955 = vrot.slane %v954, 1
    %v956 = vadd.f32 %v954, %v955
    %957 = vst [vmem:[#allocation2] sm:$0x1] %v956
    %v958 = vmul.f32 %v892, %v51
    %v959 = vrot.slane %v958, 4
    %v960 = vadd.f32 %v958, %v959
    %v961 = vrot.slane %v960, 2
    %v962 = vadd.f32 %v960, %v961
    %v963 = vrot.slane %v962, 1
    %v964 = vadd.f32 %v962, %v963
    %965 = vst [vmem:[#allocation2 + $0x1] sm:$0x1] %v964
    %v966 = vmul.f32 %v896, %v83
    %v967 = vrot.slane %v966, 4
    %v968 = vadd.f32 %v966, %v967
    %v969 = vrot.slane %v968, 2
    %v970 = vadd.f32 %v968, %v969
    %v971 = vrot.slane %v970, 1
    %v972 = vadd.f32 %v970, %v971
    %973 = vst [vmem:[#allocation2 + $0x2] sm:$0x1] %v972
    %v974 = vmul.f32 %v900, %v83
    %v975 = vrot.slane %v974, 4
    %v976 = vadd.f32 %v974, %v975
    %v977 = vrot.slane %v976, 2
    %v978 = vadd.f32 %v976, %v977
    %v979 = vrot.slane %v978, 1
    %v980 = vadd.f32 %v978, %v979
    %981 = vst [vmem:[#allocation2 + $0x3] sm:$0x1] %v980
    %v982 = vmul.f32 %v904, %v123
    %v983 = vmul.f32 %v908, %v124
    %v984 = vadd.f32 %v982, %v983
    %v985 = vrot.slane %v984, 4
    %v986 = vadd.f32 %v984, %v985
    %v987 = vrot.slane %v986, 2
    %v988 = vadd.f32 %v986, %v987
    %v989 = vrot.slane %v988, 1
    %v990 = vadd.f32 %v988, %v989
    %991 = vst [vmem:[#allocation2 + $0x4] sm:$0x1] %v990
    %v992 = vmul.f32 %v912, %v123
    %v993 = vmul.f32 %v916, %v124
    %v994 = vadd.f32 %v992, %v993
    %v995 = vrot.slane %v994, 4
    %v996 = vadd.f32 %v994, %v995
    %v997 = vrot.slane %v996, 2
    %v998 = vadd.f32 %v996, %v997
    %v999 = vrot.slane %v998, 1
    %v1000 = vadd.f32 %v998, %v999
    %1001 = vst [vmem:[#allocation2 + $0x5] sm:$0x1] %v1000
    %v1002 = vmul.f32 %v920, %v179
    %v1003 = vmul.f32 %v924, %v180
    %v1004 = vmul.f32 %v928, %v181
    %v1005 = vmul.f32 %v932, %v182
    %v1006 = vadd.f32 %v1002, %v1003
    %v1007 = vadd.f32 %v1006, %v1004
    %v1008 = vadd.f32 %v1007, %v1005
    %v1009 = vrot.slane %v1008, 4
    %v1010 = vadd.f32 %v1008, %v1009
    %v1011 = vrot.slane %v1010, 2
    %v1012 = vadd.f32 %v1010, %v1011
    %v1013 = vrot.slane %v1012, 1
    %v1014 = vadd.f32 %v1012, %v1013
    %1015 = vst [vmem:[#allocation2 + $0x6] sm:$0x1] %v1014
    %v1016 = vmul.f32 %v936, %v179
    %v1017 = vmul.f32 %v940, %v180
    %v1018 = vmul.f32 %v944, %v181
    %v1019 = vmul.f32 %v948, %v182
    %v1020 = vadd.f32 %v1016, %v1017
    %v1021 = vadd.f32 %v1020, %v1018
    %v1022 = vadd.f32 %v1021, %v1019
    %v1023 = vrot.slane %v1022, 4
    %v1024 = vadd.f32 %v1022, %v1023
    %v1025 = vrot.slane %v1024, 2
    %v1026 = vadd.f32 %v1024, %v1025
    %v1027 = vrot.slane %v1026, 1
    %v1028 = vadd.f32 %v1026, %v1027
    %1029 = vst [vmem:[#allocation2 + $0x7] sm:$0x1] %v1028
    // Predicated region
    $region10: #{tpu_custom_call.1} parent=1 // pred_check
      _
    $region11: #{tpu_custom_call.1} parent=1 // pred_check_branch
      %1031 = sbr.rel (0) target = $region13
    $region12: #{tpu_custom_call.1} parent=1 // pred_region
      %1033 = vsyncadd [#allocation3], 0
      %s1035 = sshll.u32 [#allocation2], 4
      %s1036 = int_to_ptr.vmem [resolvable:$true] %s1035
      %s1037 = sshll.u32 %s2, 4
      %s1038 = int_to_ptr.hbm [resolvable:$true] %s1037
      %1040 = dma.vmem_to_hbm [thread:$0]  %s1036, 128, %s1038, [#allocation3]
    $region13: #{tpu_custom_call.1} parent=1 // pred_fallthru
      _
    // Predicated region
    $region14: #{tpu_custom_call.1} parent=1 // pred_check
      _
    $region15: #{tpu_custom_call.1} parent=1 // pred_check_branch
      %1042 = sbr.rel (0) target = $region17
    $region16: #{tpu_custom_call.1} parent=1 // pred_region
      %1044 = dma.done [#allocation3], 128
    $region17: #{tpu_custom_call.1} parent=1 // pred_fallthru
      _
    %1045 = vsyncpa [#allocation3], 1

</llo_original>
